<compile_context>
chip_gen: v5e
topology: v5e:2x2
jax: 0.10.0
libtpu: 0.0.40
codegen_flags: <defaults>
</compile_context>

<pallas_src>
import jax
import jax.numpy as jnp
from jax.experimental import pallas as pl
from jax.experimental.pallas import tpu as pltpu

LANE = 128
MAX_TILE_B = 4096   # batch rows per grid step (multiple of 128)


def _round_up(n, m):
    return ((n + m - 1) // m) * m


def _cdiv(a, b):
    return -(-a // b)


def _pad2d(a, rows, cols):
    r, c = a.shape
    return jnp.pad(a, ((0, rows - r), (0, cols - c)))


def mlp_kernel(x_ref,
               w1_ref, b1_ref, w2_ref, b2_ref, w3_ref, b3_ref,
               w4_ref, b4_ref, w5_ref, b5_ref,
               o_ref):
    """One batch tile: 4 MXU matmuls + f32 bias/ReLU, then the 20->1 output
    layer as one broadcast-multiply + lane-reduce into a lane-dense
    (n_row_blocks, 128) slab (batch index within the tile = row*128 + lane)."""
    cdt = w1_ref.dtype                 # MXU compute dtype (f32 exact, or bf16)
    n_row_blocks = o_ref.shape[1]      # tile_b // 128

    h = jnp.dot(x_ref[...].astype(cdt), w1_ref[...],
                preferred_element_type=jnp.float32)
    h = jnp.maximum(h + b1_ref[...], 0.0)

    h = jnp.dot(h.astype(cdt), w2_ref[...], preferred_element_type=jnp.float32)
    h = jnp.maximum(h + b2_ref[...], 0.0)

    h = jnp.dot(h.astype(cdt), w3_ref[...], preferred_element_type=jnp.float32)
    h = jnp.maximum(h + b3_ref[...], 0.0)

    h = jnp.dot(h.astype(cdt), w4_ref[...], preferred_element_type=jnp.float32)
    h = jnp.maximum(h + b4_ref[...], 0.0)

    # Final layer, fully vectorized:
    #   out[r*128 + j] = sum_k h[r*128 + j, k] * w5[k] + b5
    # One VPU broadcast-multiply + one XLU lane-reduce + ONE dense store —
    # no per-chunk transposes, 1-row matmuls or single-sublane stores.
    w5 = w5_ref[...].astype(jnp.float32)          # (1, 128), zero past col 20
    h3 = h.reshape(n_row_blocks, LANE, LANE)      # (row-block, batch-in-block, feature)
    slab = jnp.sum(h3 * w5.reshape(1, 1, LANE), axis=-1)   # (n_row_blocks, 128)
    o_ref[0, :, :] = slab + b5_ref[...]           # b5 (1,128) broadcasts over rows


def prepare_params(params, input_size, compute_dtype=jnp.float32):
    """One-time prep (hoisted out of the hot path): transpose to (in, out) and
    zero-pad hidden dims to 128 lanes.  compute_dtype=jnp.bfloat16 is
    recommended on ALL TPU generations (the v5e MXU is bf16-native as well);
    biases stay f32 so the bias/ReLU path is exact and v5e-VPU friendly."""
    pdims = [input_size] + [_round_up(d, LANE) for d in (10, 20, 30, 20)]
    prepped = []
    for i in range(4):
        w = jnp.asarray(params[f"W{i + 1}"], jnp.float32)      # (out, in)
        b = jnp.asarray(params[f"b{i + 1}"], jnp.float32)      # (out,)
        prepped.append(_pad2d(w.T, pdims[i], pdims[i + 1]).astype(compute_dtype))
        prepped.append(_pad2d(b[None, :], 1, pdims[i + 1]))    # f32 bias row
    w5 = jnp.asarray(params["W5"], jnp.float32)                # (1, 20)
    b5 = jnp.asarray(params["b5"], jnp.float32)                # (1,)
    prepped.append(_pad2d(w5, 1, pdims[4]))                    # (1, 128) f32
    prepped.append(jnp.full((1, LANE), b5[0], jnp.float32))    # (1, 128) f32
    return tuple(prepped)


@jax.jit
def network3_forward(x, prepped):
    """x: (B, input_size) float32, prepped: output of prepare_params.
    Returns (B, 1) float32, matching the torch module."""
    B, input_size = x.shape
    Bp = _round_up(max(B, 1), LANE)

    # >= 2 grid steps whenever there is more than one 128-row stripe, so the
    # "parallel" batch axis can be split across v7x's two TensorCores; more
    # steps only when a single tile would exceed MAX_TILE_B.
    num_steps = max(_cdiv(Bp, MAX_TILE_B), 2 if Bp > LANE else 1)
    tile_b = _round_up(_cdiv(Bp, num_steps), LANE)
    n_row_blocks = tile_b // LANE
    Bpad = num_steps * tile_b          # < Bp + 128*num_steps (tiny overshoot)

    # Only the batch dim is padded; the feature dim stays unpadded in HBM
    # (4x less x traffic than padding K=32 -> 128).
    x_p = jnp.pad(x.astype(jnp.float32), ((0, Bpad - B), (0, 0)))

    in_specs = [pl.BlockSpec((tile_b, input_size), lambda i: (i, 0))]
    # Constant index_maps: weights/biases fetched once, VMEM-resident across
    # the whole batch grid.
    in_specs += [pl.BlockSpec(p.shape, lambda i: (0, 0)) for p in prepped]

    out_p = pl.pallas_call(
        mlp_kernel,
        out_shape=jax.ShapeDtypeStruct((num_steps, n_row_blocks, LANE),
                                       jnp.float32),
        grid=(num_steps,),
        in_specs=in_specs,
        # 3-D output: last two block dims equal the full array dims, so the
        # lane-dense slab store is always layout-legal, for any tile_b.
        out_specs=pl.BlockSpec((1, n_row_blocks, LANE), lambda i: (i, 0, 0)),
        compiler_params=pltpu.CompilerParams(
            dimension_semantics=("parallel",),
            vmem_limit_bytes=32 * 1024 * 1024),
    )(x_p, *prepped)

    # Lane-dense slab -> (B, 1) column, matching torch output shape.
    return out_p.reshape(Bpad, 1)[:B]


def init_params(key, input_size):
    """Deterministic init mimicking torch.nn.Linear default (uniform ±1/sqrt(fan_in))."""
    dims = [input_size, 10, 20, 30, 20, 1]
    params = {}
    for i in range(5):
        fan_in, fan_out = dims[i], dims[i + 1]
        key, kw, kb = jax.random.split(key, 3)
        bound = 1.0 / jnp.sqrt(fan_in)
        params[f"W{i+1}"] = jax.random.uniform(
            kw, (fan_out, fan_in), jnp.float32, -bound, bound)
        params[f"b{i+1}"] = jax.random.uniform(
            kb, (fan_out,), jnp.float32, -bound, bound)
    return params


def _reference_forward(x, params):
    h = x
    for i in range(5):
        h = h @ params[f"W{i+1}"].T + params[f"b{i+1}"]
        if i < 4:
            h = jnp.maximum(h, 0.0)
    return h


if __name__ == "__main__":
    key = jax.random.PRNGKey(0)
    input_size = 32

    kx, kp = jax.random.split(key)
    params = init_params(kp, input_size)

    prepped_f32 = prepare_params(params, input_size)                 # exact path
    prepped_bf16 = prepare_params(params, input_size, jnp.bfloat16)  # fast path

    # batch=8: single grid step.  batch=300: non-multiple-of-128 batch that
    # exercises the 2-step "parallel" grid, the padded last stripe and the
    # multi-row-block vectorized epilogue.
    for batch in (8, 300):
        x = jax.random.normal(jax.random.fold_in(kx, batch),
                              (batch, input_size), jnp.float32)
        ref = _reference_forward(x, params)

        out = jax.block_until_ready(network3_forward(x, prepped_f32))
        assert out.shape == (batch, 1), out.shape
        assert jnp.allclose(out, ref, atol=1e-4, rtol=1e-4), (out, ref)

        out_bf16 = jax.block_until_ready(network3_forward(x, prepped_bf16))
        assert out_bf16.shape == (batch, 1), out_bf16.shape
        assert jnp.allclose(out_bf16, ref, atol=5e-2, rtol=5e-2), (out_bf16, ref)

    print("KERNEL_OK")
</pallas_src>

<mosaic_0001>
module attributes {stable_mosaic.version = 11 : i64} {
  func.func @mlp_kernel(%arg0: i32, %arg1: memref<128x32xf32, #tpu.memory_space<vmem>>, %arg2: memref<32x128xf32, #tpu.memory_space<vmem>>, %arg3: memref<1x128xf32, #tpu.memory_space<vmem>>, %arg4: memref<128x128xf32, #tpu.memory_space<vmem>>, %arg5: memref<1x128xf32, #tpu.memory_space<vmem>>, %arg6: memref<128x128xf32, #tpu.memory_space<vmem>>, %arg7: memref<1x128xf32, #tpu.memory_space<vmem>>, %arg8: memref<128x128xf32, #tpu.memory_space<vmem>>, %arg9: memref<1x128xf32, #tpu.memory_space<vmem>>, %arg10: memref<1x128xf32, #tpu.memory_space<vmem>>, %arg11: memref<1x128xf32, #tpu.memory_space<vmem>>, %arg12: memref<1x1x128xf32, #tpu.memory_space<vmem>>) attributes {dimension_semantics = [#tpu.dimension_semantics<parallel>], iteration_bounds = array<i64: 1>, scalar_prefetch = 0 : i64, scratch_operands = 0 : i64, tpu.core_type = #tpu.core_type<tc>, window_params = [{transform_indices = @transform_0, window_bounds = array<i64: 128, 32>}, {pipeline_mode = #tpu.pipeline_mode<synchronous>, transform_indices = @transform_1, window_bounds = array<i64: 32, 128>}, {pipeline_mode = #tpu.pipeline_mode<synchronous>, transform_indices = @transform_2, window_bounds = array<i64: 1, 128>}, {pipeline_mode = #tpu.pipeline_mode<synchronous>, transform_indices = @transform_3, window_bounds = array<i64: 128, 128>}, {pipeline_mode = #tpu.pipeline_mode<synchronous>, transform_indices = @transform_4, window_bounds = array<i64: 1, 128>}, {pipeline_mode = #tpu.pipeline_mode<synchronous>, transform_indices = @transform_5, window_bounds = array<i64: 128, 128>}, {pipeline_mode = #tpu.pipeline_mode<synchronous>, transform_indices = @transform_6, window_bounds = array<i64: 1, 128>}, {pipeline_mode = #tpu.pipeline_mode<synchronous>, transform_indices = @transform_7, window_bounds = array<i64: 128, 128>}, {pipeline_mode = #tpu.pipeline_mode<synchronous>, transform_indices = @transform_8, window_bounds = array<i64: 1, 128>}, {pipeline_mode = #tpu.pipeline_mode<synchronous>, transform_indices = @transform_9, window_bounds = array<i64: 1, 128>}, {pipeline_mode = #tpu.pipeline_mode<synchronous>, transform_indices = @transform_10, window_bounds = array<i64: 1, 128>}, {transform_indices = @transform_11, window_bounds = array<i64: 1, 1, 128>}]} {
    %c0 = arith.constant 0 : index
    %c0_0 = arith.constant 0 : index
    %0 = vector.load %arg1[%c0, %c0_0] : memref<128x32xf32, #tpu.memory_space<vmem>>, vector<128x32xf32>
    %c0_1 = arith.constant 0 : index
    %c0_2 = arith.constant 0 : index
    %1 = vector.load %arg2[%c0_1, %c0_2] : memref<32x128xf32, #tpu.memory_space<vmem>>, vector<32x128xf32>
    %cst = arith.constant dense<0.000000e+00> : vector<128x128xf32>
    %2 = tpu.matmul %0, %1, %cst {dimension_numbers = #tpu.dot_dimension_numbers<[1], [0], [0], [1], [0, 0, 1, 1], [], []>} : vector<128x32xf32>, vector<32x128xf32>, vector<128x128xf32> -> vector<128x128xf32>
    %c0_3 = arith.constant 0 : index
    %c0_4 = arith.constant 0 : index
    %3 = vector.load %arg3[%c0_3, %c0_4] : memref<1x128xf32, #tpu.memory_space<vmem>>, vector<1x128xf32>
    %4 = vector.broadcast %3 : vector<1x128xf32> to vector<128x128xf32>
    %5 = arith.addf %2, %4 : vector<128x128xf32>
    %cst_5 = arith.constant 0.000000e+00 : f32
    %6 = vector.broadcast %cst_5 : f32 to vector<128x128xf32>
    %7 = arith.maximumf %5, %6 : vector<128x128xf32>
    %c0_6 = arith.constant 0 : index
    %c0_7 = arith.constant 0 : index
    %8 = vector.load %arg4[%c0_6, %c0_7] : memref<128x128xf32, #tpu.memory_space<vmem>>, vector<128x128xf32>
    %cst_8 = arith.constant dense<0.000000e+00> : vector<128x128xf32>
    %9 = tpu.matmul %7, %8, %cst_8 {dimension_numbers = #tpu.dot_dimension_numbers<[1], [0], [0], [1], [0, 0, 1, 1], [], []>} : vector<128x128xf32>, vector<128x128xf32>, vector<128x128xf32> -> vector<128x128xf32>
    %c0_9 = arith.constant 0 : index
    %c0_10 = arith.constant 0 : index
    %10 = vector.load %arg5[%c0_9, %c0_10] : memref<1x128xf32, #tpu.memory_space<vmem>>, vector<1x128xf32>
    %11 = vector.broadcast %10 : vector<1x128xf32> to vector<128x128xf32>
    %12 = arith.addf %9, %11 : vector<128x128xf32>
    %cst_11 = arith.constant 0.000000e+00 : f32
    %13 = vector.broadcast %cst_11 : f32 to vector<128x128xf32>
    %14 = arith.maximumf %12, %13 : vector<128x128xf32>
    %c0_12 = arith.constant 0 : index
    %c0_13 = arith.constant 0 : index
    %15 = vector.load %arg6[%c0_12, %c0_13] : memref<128x128xf32, #tpu.memory_space<vmem>>, vector<128x128xf32>
    %cst_14 = arith.constant dense<0.000000e+00> : vector<128x128xf32>
    %16 = tpu.matmul %14, %15, %cst_14 {dimension_numbers = #tpu.dot_dimension_numbers<[1], [0], [0], [1], [0, 0, 1, 1], [], []>} : vector<128x128xf32>, vector<128x128xf32>, vector<128x128xf32> -> vector<128x128xf32>
    %c0_15 = arith.constant 0 : index
    %c0_16 = arith.constant 0 : index
    %17 = vector.load %arg7[%c0_15, %c0_16] : memref<1x128xf32, #tpu.memory_space<vmem>>, vector<1x128xf32>
    %18 = vector.broadcast %17 : vector<1x128xf32> to vector<128x128xf32>
    %19 = arith.addf %16, %18 : vector<128x128xf32>
    %cst_17 = arith.constant 0.000000e+00 : f32
    %20 = vector.broadcast %cst_17 : f32 to vector<128x128xf32>
    %21 = arith.maximumf %19, %20 : vector<128x128xf32>
    %c0_18 = arith.constant 0 : index
    %c0_19 = arith.constant 0 : index
    %22 = vector.load %arg8[%c0_18, %c0_19] : memref<128x128xf32, #tpu.memory_space<vmem>>, vector<128x128xf32>
    %cst_20 = arith.constant dense<0.000000e+00> : vector<128x128xf32>
    %23 = tpu.matmul %21, %22, %cst_20 {dimension_numbers = #tpu.dot_dimension_numbers<[1], [0], [0], [1], [0, 0, 1, 1], [], []>} : vector<128x128xf32>, vector<128x128xf32>, vector<128x128xf32> -> vector<128x128xf32>
    %c0_21 = arith.constant 0 : index
    %c0_22 = arith.constant 0 : index
    %24 = vector.load %arg9[%c0_21, %c0_22] : memref<1x128xf32, #tpu.memory_space<vmem>>, vector<1x128xf32>
    %25 = vector.broadcast %24 : vector<1x128xf32> to vector<128x128xf32>
    %26 = arith.addf %23, %25 : vector<128x128xf32>
    %cst_23 = arith.constant 0.000000e+00 : f32
    %27 = vector.broadcast %cst_23 : f32 to vector<128x128xf32>
    %28 = arith.maximumf %26, %27 : vector<128x128xf32>
    %c0_24 = arith.constant 0 : index
    %c0_25 = arith.constant 0 : index
    %29 = vector.load %arg10[%c0_24, %c0_25] : memref<1x128xf32, #tpu.memory_space<vmem>>, vector<1x128xf32>
    %30 = vector.shape_cast %28 : vector<128x128xf32> to vector<1x128x128xf32>
    %31 = vector.shape_cast %29 : vector<1x128xf32> to vector<1x1x128xf32>
    %32 = vector.broadcast %31 : vector<1x1x128xf32> to vector<1x128x128xf32>
    %33 = arith.mulf %30, %32 : vector<1x128x128xf32>
    %cst_26 = arith.constant dense<0.000000e+00> : vector<1x128xf32>
    %34 = vector.multi_reduction <add>, %33, %cst_26 [2] : vector<1x128x128xf32> to vector<1x128xf32>
    %c0_27 = arith.constant 0 : index
    %c0_28 = arith.constant 0 : index
    %35 = vector.load %arg11[%c0_27, %c0_28] : memref<1x128xf32, #tpu.memory_space<vmem>>, vector<1x128xf32>
    %36 = arith.addf %34, %35 : vector<1x128xf32>
    %c0_29 = arith.constant 0 : index
    %c0_30 = arith.constant 0 : index
    %c0_31 = arith.constant 0 : index
    %37 = vector.load %arg12[%c0_29, %c0_30, %c0_31] : memref<1x1x128xf32, #tpu.memory_space<vmem>>, vector<1x1x128xf32>
    %38 = vector.shape_cast %37 : vector<1x1x128xf32> to vector<1x128xf32>
    %39 = vector.shape_cast %36 : vector<1x128xf32> to vector<1x1x128xf32>
    tpu.vector_store %arg12[%c0_29, %c0_30, %c0_31], %39 {strides = array<i32>} : memref<1x1x128xf32, #tpu.memory_space<vmem>>, vector<1x1x128xf32>,
    return
  }
  func.func @transform_0(%arg0: i32) -> (i32, i32) {
    %c0_i32 = arith.constant 0 : i32
    %c0_i32_0 = arith.constant 0 : i32
    return %arg0, %c0_i32 : i32, i32
  }
  func.func @transform_1(%arg0: i32) -> (i32, i32) {
    %c0_i32 = arith.constant 0 : i32
    %c0_i32_0 = arith.constant 0 : i32
    %c0_i32_1 = arith.constant 0 : i32
    return %c0_i32, %c0_i32_0 : i32, i32
  }
  func.func @transform_2(%arg0: i32) -> (i32, i32) {
    %c0_i32 = arith.constant 0 : i32
    %c0_i32_0 = arith.constant 0 : i32
    %c0_i32_1 = arith.constant 0 : i32
    return %c0_i32, %c0_i32_0 : i32, i32
  }
  func.func @transform_3(%arg0: i32) -> (i32, i32) {
    %c0_i32 = arith.constant 0 : i32
    %c0_i32_0 = arith.constant 0 : i32
    %c0_i32_1 = arith.constant 0 : i32
    return %c0_i32, %c0_i32_0 : i32, i32
  }
  func.func @transform_4(%arg0: i32) -> (i32, i32) {
    %c0_i32 = arith.constant 0 : i32
    %c0_i32_0 = arith.constant 0 : i32
    %c0_i32_1 = arith.constant 0 : i32
    return %c0_i32, %c0_i32_0 : i32, i32
  }
  func.func @transform_5(%arg0: i32) -> (i32, i32) {
    %c0_i32 = arith.constant 0 : i32
    %c0_i32_0 = arith.constant 0 : i32
    %c0_i32_1 = arith.constant 0 : i32
    return %c0_i32, %c0_i32_0 : i32, i32
  }
  func.func @transform_6(%arg0: i32) -> (i32, i32) {
    %c0_i32 = arith.constant 0 : i32
    %c0_i32_0 = arith.constant 0 : i32
    %c0_i32_1 = arith.constant 0 : i32
    return %c0_i32, %c0_i32_0 : i32, i32
  }
  func.func @transform_7(%arg0: i32) -> (i32, i32) {
    %c0_i32 = arith.constant 0 : i32
    %c0_i32_0 = arith.constant 0 : i32
    %c0_i32_1 = arith.constant 0 : i32
    return %c0_i32, %c0_i32_0 : i32, i32
  }
  func.func @transform_8(%arg0: i32) -> (i32, i32) {
    %c0_i32 = arith.constant 0 : i32
    %c0_i32_0 = arith.constant 0 : i32
    %c0_i32_1 = arith.constant 0 : i32
    return %c0_i32, %c0_i32_0 : i32, i32
  }
  func.func @transform_9(%arg0: i32) -> (i32, i32) {
    %c0_i32 = arith.constant 0 : i32
    %c0_i32_0 = arith.constant 0 : i32
    %c0_i32_1 = arith.constant 0 : i32
    return %c0_i32, %c0_i32_0 : i32, i32
  }
  func.func @transform_10(%arg0: i32) -> (i32, i32) {
    %c0_i32 = arith.constant 0 : i32
    %c0_i32_0 = arith.constant 0 : i32
    %c0_i32_1 = arith.constant 0 : i32
    return %c0_i32, %c0_i32_0 : i32, i32
  }
  func.func @transform_11(%arg0: i32) -> (i32, i32, i32) {
    %c0_i32 = arith.constant 0 : i32
    %c0_i32_0 = arith.constant 0 : i32
    %c0_i32_1 = arith.constant 0 : i32
    return %arg0, %c0_i32, %c0_i32_0 : i32, i32, i32
  }
}

</mosaic_0001>

<llo_original>
// kernel: network3_forward.1
$region0: #{network3_forward.1}
  #allocation0 [shape = 'u32[]', space=smem, size = 0x4, offset = 0x4, fixed_abs, tag = 'smem constant byte address 0x4 - core index']
  #allocation1 [shape = 'u32[72,128]{1,0:T(1,128)}', space=vmem, size = 0x9000, scoped, tag = 'internal scratch']
  %s0 = inlined_call_operand.vmem [shape: f32[128,32], index: 0, kind: input, shape index: {}]
  %s1 = inlined_call_operand.hbm [shape: f32[32,128], index: 1, kind: input, shape index: {}]
  %s2 = inlined_call_operand.vmem [shape: f32[1,128], index: 2, kind: input, shape index: {}]
  %s3 = inlined_call_operand.vmem [shape: f32[128,128], index: 3, kind: input, shape index: {}]
  %s4 = inlined_call_operand.vmem [shape: f32[1,128], index: 4, kind: input, shape index: {}]
  %s5 = inlined_call_operand.hbm [shape: f32[128,128], index: 5, kind: input, shape index: {}]
  %s6 = inlined_call_operand.vmem [shape: f32[1,128], index: 6, kind: input, shape index: {}]
  %s7 = inlined_call_operand.hbm [shape: f32[128,128], index: 7, kind: input, shape index: {}]
  %s8 = inlined_call_operand.vmem [shape: f32[1,128], index: 8, kind: input, shape index: {}]
  %s9 = inlined_call_operand.vmem [shape: f32[1,128], index: 9, kind: input, shape index: {}]
  %s10 = inlined_call_operand.vmem [shape: f32[1,128], index: 10, kind: input, shape index: {}]
  %s11 = inlined_call_operand.vmem [shape: f32[1,1,128], index: 11, kind: output, shape index: {}]
  %s12 = sld [smem:[#allocation0]]
  $region66: #{network3_forward.1} parent=0
    _
  %s14 = ssub.s32 1, %s12
  %s15 = scalar_select 0, %s14, %s12
  $region1: #{network3_forward.1} parent=0
    #allocation2 [shape = 'u8[16384]{0}', space=vmem, size = 0x4000, scoped, tag = 'input window, operand 1, single buffered']
    #allocation3 [shape = 's32[1]{0}', space=sflag, size = 0x4, scoped, tag = 'scoped memory for network3_forward.1']
    #allocation4 [shape = 'u8[65536]{0}', space=vmem, size = 0x10000, scoped, tag = 'input window, operand 5, single buffered']
    #allocation5 [shape = 's32[1]{0}', space=sflag, size = 0x4, scoped, tag = 'scoped memory for network3_forward.1']
    #allocation6 [shape = 'u8[65536]{0}', space=vmem, size = 0x10000, scoped, tag = 'input window, operand 7, single buffered']
    %16 = vsyncpa [#allocation3], 0
    %17 = vsyncpa [#allocation5], 0
    // Predicated region
    $region2: #{network3_forward.1} parent=1 // pred_check
      _
    $region3: #{network3_forward.1} parent=1 // pred_check_branch
      %19 = sbr.rel (0) target = $region5
    $region4: #{network3_forward.1} parent=1 // pred_region
      _
    $region5: #{network3_forward.1} parent=1 // pred_fallthru
      _
    // Predicated region
    $region6: #{network3_forward.1} parent=1 // pred_check
      _
    $region7: #{network3_forward.1} parent=1 // pred_check_branch
      %21 = sbr.rel (0) target = $region9
    $region8: #{network3_forward.1} parent=1 // pred_region
      %23 = vsyncadd [#allocation3], 0
      %s24 = sshll.u32 %s1, 4
      %s25 = int_to_ptr.hbm [resolvable:$true] %s24
      %s26 = sshll.u32 [#allocation2], 4
      %s27 = int_to_ptr.vmem [resolvable:$true] %s26
      %32 = dma.hbm_to_vmem [thread:$0]  %s25, 512, %s27, [#allocation3], 128, 128, 8
    $region9: #{network3_forward.1} parent=1 // pred_fallthru
      _
    // Predicated region
    $region10: #{network3_forward.1} parent=1 // pred_check
      _
    $region11: #{network3_forward.1} parent=1 // pred_check_branch
      %34 = sbr.rel (0) target = $region13
    $region12: #{network3_forward.1} parent=1 // pred_region
      _
    $region13: #{network3_forward.1} parent=1 // pred_fallthru
      _
    // Predicated region
    $region14: #{network3_forward.1} parent=1 // pred_check
      _
    $region15: #{network3_forward.1} parent=1 // pred_check_branch
      %36 = sbr.rel (0) target = $region17
    $region16: #{network3_forward.1} parent=1 // pred_region
      _
    $region17: #{network3_forward.1} parent=1 // pred_fallthru
      _
    // Predicated region
    $region18: #{network3_forward.1} parent=1 // pred_check
      _
    $region19: #{network3_forward.1} parent=1 // pred_check_branch
      %38 = sbr.rel (0) target = $region21
    $region20: #{network3_forward.1} parent=1 // pred_region
      _
    $region21: #{network3_forward.1} parent=1 // pred_fallthru
      _
    // Predicated region
    $region22: #{network3_forward.1} parent=1 // pred_check
      _
    $region23: #{network3_forward.1} parent=1 // pred_check_branch
      %40 = sbr.rel (0) target = $region25
    $region24: #{network3_forward.1} parent=1 // pred_region
      %42 = vsyncadd [#allocation5], 0
      %s43 = sshll.u32 %s5, 4
      %s44 = int_to_ptr.hbm [resolvable:$true] %s43
      %s45 = sshll.u32 [#allocation4], 4
      %s46 = int_to_ptr.vmem [resolvable:$true] %s45
      %51 = dma.hbm_to_vmem [thread:$0]  %s44, 2048, %s46, [#allocation5], 128, 128, 8
    $region25: #{network3_forward.1} parent=1 // pred_fallthru
      _
    // Predicated region
    $region26: #{network3_forward.1} parent=1 // pred_check
      _
    $region27: #{network3_forward.1} parent=1 // pred_check_branch
      %53 = sbr.rel (0) target = $region29
    $region28: #{network3_forward.1} parent=1 // pred_region
      _
    $region29: #{network3_forward.1} parent=1 // pred_fallthru
      _
    // Predicated region
    $region30: #{network3_forward.1} parent=1 // pred_check
      _
    $region31: #{network3_forward.1} parent=1 // pred_check_branch
      %55 = sbr.rel (0) target = $region33
    $region32: #{network3_forward.1} parent=1 // pred_region
      %57 = vsyncadd [#allocation5], 0
      %s58 = sshll.u32 %s7, 4
      %s59 = int_to_ptr.hbm [resolvable:$true] %s58
      %s60 = sshll.u32 [#allocation6], 4
      %s61 = int_to_ptr.vmem [resolvable:$true] %s60
      %66 = dma.hbm_to_vmem [thread:$0]  %s59, 2048, %s61, [#allocation5], 128, 128, 8
    $region33: #{network3_forward.1} parent=1 // pred_fallthru
      _
    // Predicated region
    $region34: #{network3_forward.1} parent=1 // pred_check
      _
    $region35: #{network3_forward.1} parent=1 // pred_check_branch
      %68 = sbr.rel (0) target = $region37
    $region36: #{network3_forward.1} parent=1 // pred_region
      _
    $region37: #{network3_forward.1} parent=1 // pred_fallthru
      _
    // Predicated region
    $region38: #{network3_forward.1} parent=1 // pred_check
      _
    $region39: #{network3_forward.1} parent=1 // pred_check_branch
      %70 = sbr.rel (0) target = $region41
    $region40: #{network3_forward.1} parent=1 // pred_region
      _
    $region41: #{network3_forward.1} parent=1 // pred_fallthru
      _
    // Predicated region
    $region42: #{network3_forward.1} parent=1 // pred_check
      _
    $region43: #{network3_forward.1} parent=1 // pred_check_branch
      %72 = sbr.rel (0) target = $region45
    $region44: #{network3_forward.1} parent=1 // pred_region
      _
    $region45: #{network3_forward.1} parent=1 // pred_fallthru
      _
    // Predicated region
    $region46: #{network3_forward.1} parent=1 // pred_check
      _
    $region47: #{network3_forward.1} parent=1 // pred_check_branch
      %74 = sbr.rel (0) target = $region49
    $region48: #{network3_forward.1} parent=1 // pred_region
      %76 = dma.done [#allocation3], 512
    $region49: #{network3_forward.1} parent=1 // pred_fallthru
      _
    // Predicated region
    $region50: #{network3_forward.1} parent=1 // pred_check
      _
    $region51: #{network3_forward.1} parent=1 // pred_check_branch
      %78 = sbr.rel (0) target = $region53
    $region52: #{network3_forward.1} parent=1 // pred_region
      %80 = dma.done [#allocation5], 2048
    $region53: #{network3_forward.1} parent=1 // pred_fallthru
      _
    // Predicated region
    $region54: #{network3_forward.1} parent=1 // pred_check
      _
    $region55: #{network3_forward.1} parent=1 // pred_check_branch
      %82 = sbr.rel (0) target = $region57
    $region56: #{network3_forward.1} parent=1 // pred_region
      %84 = dma.done [#allocation5], 2048
    $region57: #{network3_forward.1} parent=1 // pred_fallthru
      _
    %v85 = vld [vmem:[%s0] sm:$0xff]
    %v86 = vld [vmem:[%s0 + $0x8] sm:$0xff]
    %v87 = vld [vmem:[%s0 + $0x10] sm:$0xff]
    %v88 = vld [vmem:[%s0 + $0x18] sm:$0xff]
    %v89 = vld [vmem:[%s0 + $0x20] sm:$0xff]
    %v90 = vld [vmem:[%s0 + $0x28] sm:$0xff]
    %v91 = vld [vmem:[%s0 + $0x30] sm:$0xff]
    %v92 = vld [vmem:[%s0 + $0x38] sm:$0xff]
    %v93 = vld [vmem:[%s0 + $0x40] sm:$0xff]
    %v94 = vld [vmem:[%s0 + $0x48] sm:$0xff]
    %v95 = vld [vmem:[%s0 + $0x50] sm:$0xff]
    %v96 = vld [vmem:[%s0 + $0x58] sm:$0xff]
    %v97 = vld [vmem:[%s0 + $0x60] sm:$0xff]
    %v98 = vld [vmem:[%s0 + $0x68] sm:$0xff]
    %v99 = vld [vmem:[%s0 + $0x70] sm:$0xff]
    %v100 = vld [vmem:[%s0 + $0x78] sm:$0xff]
    %v101 = vld [vmem:[#allocation2] sm:$0xff]
    %v102 = vld [vmem:[#allocation2 + $0x8] sm:$0xff]
    %v103 = vld [vmem:[#allocation2 + $0x10] sm:$0xff]
    %v104 = vld [vmem:[#allocation2 + $0x18] sm:$0xff]
    %v105 = vld [vmem:[%s2] sm:$0x1]
    %v107 = vperm.slane %v105, 0
    %vm109 = vcmask 261120
    %v111 = vsel %vm109, %v85, 0
    %v114 = vsel %vm109, %v86, 0
    %v117 = vsel %vm109, %v87, 0
    %v120 = vsel %vm109, %v88, 0
    %v123 = vsel %vm109, %v89, 0
    %v126 = vsel %vm109, %v90, 0
    %v129 = vsel %vm109, %v91, 0
    %v132 = vsel %vm109, %v92, 0
    %v135 = vsel %vm109, %v93, 0
    %v138 = vsel %vm109, %v94, 0
    %v141 = vsel %vm109, %v95, 0
    %v144 = vsel %vm109, %v96, 0
    %v147 = vsel %vm109, %v97, 0
    %v150 = vsel %vm109, %v98, 0
    %v153 = vsel %vm109, %v99, 0
    %v156 = vsel %vm109, %v100, 0
    %158 = vmatpush.msra.mxu0 0.0
    %159 = vmatpush.msra.mxu0 0.0
    %160 = vmatpush.msra.mxu0 0.0
    %161 = vmatpush.msra.mxu0 0.0
    %162 = vmatpush.msra.mxu0 0.0
    %163 = vmatpush.msra.mxu0 0.0
    %164 = vmatpush.msra.mxu0 0.0
    %165 = vmatpush.msra.mxu0 0.0
    %166 = vmatpush.msra.mxu0 0.0
    %167 = vmatpush.msra.mxu0 0.0
    %168 = vmatpush.msra.mxu0 0.0
    %169 = vmatpush.msra.mxu0 0.0
    %170 = vmatpush.msra.mxu0 %v104
    %171 = vmatpush.msra.mxu0 %v103
    %172 = vmatpush.msra.mxu0 %v102
    %173 = vmatpush.msra.mxu0 %v101
    %174 = vmatmul.f32.gmra.mxu0 %v111
    %v175 = vpop.f32.mrf.mxu0
    %v176 = vadd.f32 %v107, %v175
    %177 = vmatmul.f32.gmra.mxu0 %v114
    %v178 = vpop.f32.mrf.mxu0
    %v179 = vadd.f32 %v107, %v178
    %180 = vmatmul.f32.gmra.mxu0 %v117
    %v181 = vpop.f32.mrf.mxu0
    %v182 = vadd.f32 %v107, %v181
    %183 = vmatmul.f32.gmra.mxu0 %v120
    %v184 = vpop.f32.mrf.mxu0
    %v185 = vadd.f32 %v107, %v184
    %186 = vmatmul.f32.gmra.mxu0 %v123
    %v187 = vpop.f32.mrf.mxu0
    %v188 = vadd.f32 %v107, %v187
    %189 = vmatmul.f32.gmra.mxu0 %v126
    %v190 = vpop.f32.mrf.mxu0
    %v191 = vadd.f32 %v107, %v190
    %192 = vmatmul.f32.gmra.mxu0 %v129
    %v193 = vpop.f32.mrf.mxu0
    %v194 = vadd.f32 %v107, %v193
    %195 = vmatmul.f32.gmra.mxu0 %v132
    %v196 = vpop.f32.mrf.mxu0
    %v197 = vadd.f32 %v107, %v196
    %198 = vmatmul.f32.gmra.mxu0 %v135
    %v199 = vpop.f32.mrf.mxu0
    %v200 = vadd.f32 %v107, %v199
    %201 = vmatmul.f32.gmra.mxu0 %v138
    %v202 = vpop.f32.mrf.mxu0
    %v203 = vadd.f32 %v107, %v202
    %204 = vmatmul.f32.gmra.mxu0 %v141
    %v205 = vpop.f32.mrf.mxu0
    %v206 = vadd.f32 %v107, %v205
    %207 = vmatmul.f32.gmra.mxu0 %v144
    %v208 = vpop.f32.mrf.mxu0
    %v209 = vadd.f32 %v107, %v208
    %210 = vmatmul.f32.gmra.mxu0 %v147
    %v211 = vpop.f32.mrf.mxu0
    %v212 = vadd.f32 %v107, %v211
    %213 = vmatmul.f32.gmra.mxu0 %v150
    %v214 = vpop.f32.mrf.mxu0
    %v215 = vadd.f32 %v107, %v214
    %216 = vmatmul.f32.gmra.mxu0 %v153
    %v217 = vpop.f32.mrf.mxu0
    %v218 = vadd.f32 %v107, %v217
    %219 = vmatmul.f32.gmra.mxu0 %v156
    %v220 = vpop.f32.mrf.mxu0
    %v221 = vadd.f32 %v107, %v220
    %222 = vdwg.mxu0
    %v223 = vmax.f32 %v176, 0.0
    %v224 = vmax.f32 %v179, 0.0
    %v225 = vmax.f32 %v182, 0.0
    %v226 = vmax.f32 %v185, 0.0
    %v227 = vmax.f32 %v188, 0.0
    %v228 = vmax.f32 %v191, 0.0
    %v229 = vmax.f32 %v194, 0.0
    %v230 = vmax.f32 %v197, 0.0
    %v231 = vmax.f32 %v200, 0.0
    %v232 = vmax.f32 %v203, 0.0
    %v233 = vmax.f32 %v206, 0.0
    %v234 = vmax.f32 %v209, 0.0
    %v235 = vmax.f32 %v212, 0.0
    %v236 = vmax.f32 %v215, 0.0
    %v237 = vmax.f32 %v218, 0.0
    %v238 = vmax.f32 %v221, 0.0
    %v239 = vld [vmem:[%s3] sm:$0xff]
    %v240 = vld [vmem:[%s3 + $0x8] sm:$0xff]
    %v241 = vld [vmem:[%s3 + $0x10] sm:$0xff]
    %v242 = vld [vmem:[%s3 + $0x18] sm:$0xff]
    %v243 = vld [vmem:[%s3 + $0x20] sm:$0xff]
    %v244 = vld [vmem:[%s3 + $0x28] sm:$0xff]
    %v245 = vld [vmem:[%s3 + $0x30] sm:$0xff]
    %v246 = vld [vmem:[%s3 + $0x38] sm:$0xff]
    %v247 = vld [vmem:[%s3 + $0x40] sm:$0xff]
    %v248 = vld [vmem:[%s3 + $0x48] sm:$0xff]
    %v249 = vld [vmem:[%s3 + $0x50] sm:$0xff]
    %v250 = vld [vmem:[%s3 + $0x58] sm:$0xff]
    %v251 = vld [vmem:[%s3 + $0x60] sm:$0xff]
    %v252 = vld [vmem:[%s3 + $0x68] sm:$0xff]
    %v253 = vld [vmem:[%s3 + $0x70] sm:$0xff]
    %v254 = vld [vmem:[%s3 + $0x78] sm:$0xff]
    %v255 = vld [vmem:[%s4] sm:$0x1]
    %v257 = vperm.slane %v255, 0
    %259 = vmatpush.msra.mxu0 %v254
    %260 = vmatpush.msra.mxu0 %v253
    %261 = vmatpush.msra.mxu0 %v252
    %262 = vmatpush.msra.mxu0 %v251
    %263 = vmatpush.msra.mxu0 %v250
    %264 = vmatpush.msra.mxu0 %v249
    %265 = vmatpush.msra.mxu0 %v248
    %266 = vmatpush.msra.mxu0 %v247
    %267 = vmatpush.msra.mxu0 %v246
    %268 = vmatpush.msra.mxu0 %v245
    %269 = vmatpush.msra.mxu0 %v244
    %270 = vmatpush.msra.mxu0 %v243
    %271 = vmatpush.msra.mxu0 %v242
    %272 = vmatpush.msra.mxu0 %v241
    %273 = vmatpush.msra.mxu0 %v240
    %274 = vmatpush.msra.mxu0 %v239
    %275 = vmatmul.f32.gmra.mxu0 %v223
    %v276 = vpop.f32.mrf.mxu0
    %v277 = vadd.f32 %v257, %v276
    %278 = vmatmul.f32.gmra.mxu0 %v224
    %v279 = vpop.f32.mrf.mxu0
    %v280 = vadd.f32 %v257, %v279
    %281 = vmatmul.f32.gmra.mxu0 %v225
    %v282 = vpop.f32.mrf.mxu0
    %v283 = vadd.f32 %v257, %v282
    %284 = vmatmul.f32.gmra.mxu0 %v226
    %v285 = vpop.f32.mrf.mxu0
    %v286 = vadd.f32 %v257, %v285
    %287 = vmatmul.f32.gmra.mxu0 %v227
    %v288 = vpop.f32.mrf.mxu0
    %v289 = vadd.f32 %v257, %v288
    %290 = vmatmul.f32.gmra.mxu0 %v228
    %v291 = vpop.f32.mrf.mxu0
    %v292 = vadd.f32 %v257, %v291
    %293 = vmatmul.f32.gmra.mxu0 %v229
    %v294 = vpop.f32.mrf.mxu0
    %v295 = vadd.f32 %v257, %v294
    %296 = vmatmul.f32.gmra.mxu0 %v230
    %v297 = vpop.f32.mrf.mxu0
    %v298 = vadd.f32 %v257, %v297
    %299 = vmatmul.f32.gmra.mxu0 %v231
    %v300 = vpop.f32.mrf.mxu0
    %v301 = vadd.f32 %v257, %v300
    %302 = vmatmul.f32.gmra.mxu0 %v232
    %v303 = vpop.f32.mrf.mxu0
    %v304 = vadd.f32 %v257, %v303
    %305 = vmatmul.f32.gmra.mxu0 %v233
    %v306 = vpop.f32.mrf.mxu0
    %v307 = vadd.f32 %v257, %v306
    %308 = vmatmul.f32.gmra.mxu0 %v234
    %v309 = vpop.f32.mrf.mxu0
    %v310 = vadd.f32 %v257, %v309
    %311 = vmatmul.f32.gmra.mxu0 %v235
    %v312 = vpop.f32.mrf.mxu0
    %v313 = vadd.f32 %v257, %v312
    %314 = vmatmul.f32.gmra.mxu0 %v236
    %v315 = vpop.f32.mrf.mxu0
    %v316 = vadd.f32 %v257, %v315
    %317 = vmatmul.f32.gmra.mxu0 %v237
    %v318 = vpop.f32.mrf.mxu0
    %v319 = vadd.f32 %v257, %v318
    %320 = vmatmul.f32.gmra.mxu0 %v238
    %v321 = vpop.f32.mrf.mxu0
    %v322 = vadd.f32 %v257, %v321
    %323 = vdwg.mxu0
    %v324 = vmax.f32 %v277, 0.0
    %v325 = vmax.f32 %v280, 0.0
    %v326 = vmax.f32 %v283, 0.0
    %v327 = vmax.f32 %v286, 0.0
    %v328 = vmax.f32 %v289, 0.0
    %v329 = vmax.f32 %v292, 0.0
    %v330 = vmax.f32 %v295, 0.0
    %v331 = vmax.f32 %v298, 0.0
    %v332 = vmax.f32 %v301, 0.0
    %v333 = vmax.f32 %v304, 0.0
    %v334 = vmax.f32 %v307, 0.0
    %v335 = vmax.f32 %v310, 0.0
    %v336 = vmax.f32 %v313, 0.0
    %v337 = vmax.f32 %v316, 0.0
    %v338 = vmax.f32 %v319, 0.0
    %v339 = vmax.f32 %v322, 0.0
    %v340 = vld [vmem:[#allocation4] sm:$0xff]
    %v341 = vld [vmem:[#allocation4 + $0x8] sm:$0xff]
    %v342 = vld [vmem:[#allocation4 + $0x10] sm:$0xff]
    %v343 = vld [vmem:[#allocation4 + $0x18] sm:$0xff]
    %v344 = vld [vmem:[#allocation4 + $0x20] sm:$0xff]
    %v345 = vld [vmem:[#allocation4 + $0x28] sm:$0xff]
    %v346 = vld [vmem:[#allocation4 + $0x30] sm:$0xff]
    %v347 = vld [vmem:[#allocation4 + $0x38] sm:$0xff]
    %v348 = vld [vmem:[#allocation4 + $0x40] sm:$0xff]
    %v349 = vld [vmem:[#allocation4 + $0x48] sm:$0xff]
    %v350 = vld [vmem:[#allocation4 + $0x50] sm:$0xff]
    %v351 = vld [vmem:[#allocation4 + $0x58] sm:$0xff]
    %v352 = vld [vmem:[#allocation4 + $0x60] sm:$0xff]
    %v353 = vld [vmem:[#allocation4 + $0x68] sm:$0xff]
    %v354 = vld [vmem:[#allocation4 + $0x70] sm:$0xff]
    %v355 = vld [vmem:[#allocation4 + $0x78] sm:$0xff]
    %v356 = vld [vmem:[%s6] sm:$0x1]
    %v358 = vperm.slane %v356, 0
    %360 = vmatpush.msra.mxu0 %v355
    %361 = vmatpush.msra.mxu0 %v354
    %362 = vmatpush.msra.mxu0 %v353
    %363 = vmatpush.msra.mxu0 %v352
    %364 = vmatpush.msra.mxu0 %v351
    %365 = vmatpush.msra.mxu0 %v350
    %366 = vmatpush.msra.mxu0 %v349
    %367 = vmatpush.msra.mxu0 %v348
    %368 = vmatpush.msra.mxu0 %v347
    %369 = vmatpush.msra.mxu0 %v346
    %370 = vmatpush.msra.mxu0 %v345
    %371 = vmatpush.msra.mxu0 %v344
    %372 = vmatpush.msra.mxu0 %v343
    %373 = vmatpush.msra.mxu0 %v342
    %374 = vmatpush.msra.mxu0 %v341
    %375 = vmatpush.msra.mxu0 %v340
    %376 = vmatmul.f32.gmra.mxu0 %v324
    %v377 = vpop.f32.mrf.mxu0
    %v378 = vadd.f32 %v358, %v377
    %379 = vmatmul.f32.gmra.mxu0 %v325
    %v380 = vpop.f32.mrf.mxu0
    %v381 = vadd.f32 %v358, %v380
    %382 = vmatmul.f32.gmra.mxu0 %v326
    %v383 = vpop.f32.mrf.mxu0
    %v384 = vadd.f32 %v358, %v383
    %385 = vmatmul.f32.gmra.mxu0 %v327
    %v386 = vpop.f32.mrf.mxu0
    %v387 = vadd.f32 %v358, %v386
    %388 = vmatmul.f32.gmra.mxu0 %v328
    %v389 = vpop.f32.mrf.mxu0
    %v390 = vadd.f32 %v358, %v389
    %391 = vmatmul.f32.gmra.mxu0 %v329
    %v392 = vpop.f32.mrf.mxu0
    %v393 = vadd.f32 %v358, %v392
    %394 = vmatmul.f32.gmra.mxu0 %v330
    %v395 = vpop.f32.mrf.mxu0
    %v396 = vadd.f32 %v358, %v395
    %397 = vmatmul.f32.gmra.mxu0 %v331
    %v398 = vpop.f32.mrf.mxu0
    %v399 = vadd.f32 %v358, %v398
    %400 = vmatmul.f32.gmra.mxu0 %v332
    %v401 = vpop.f32.mrf.mxu0
    %v402 = vadd.f32 %v358, %v401
    %403 = vmatmul.f32.gmra.mxu0 %v333
    %v404 = vpop.f32.mrf.mxu0
    %v405 = vadd.f32 %v358, %v404
    %406 = vmatmul.f32.gmra.mxu0 %v334
    %v407 = vpop.f32.mrf.mxu0
    %v408 = vadd.f32 %v358, %v407
    %409 = vmatmul.f32.gmra.mxu0 %v335
    %v410 = vpop.f32.mrf.mxu0
    %v411 = vadd.f32 %v358, %v410
    %412 = vmatmul.f32.gmra.mxu0 %v336
    %v413 = vpop.f32.mrf.mxu0
    %v414 = vadd.f32 %v358, %v413
    %415 = vmatmul.f32.gmra.mxu0 %v337
    %v416 = vpop.f32.mrf.mxu0
    %v417 = vadd.f32 %v358, %v416
    %418 = vmatmul.f32.gmra.mxu0 %v338
    %v419 = vpop.f32.mrf.mxu0
    %v420 = vadd.f32 %v358, %v419
    %421 = vmatmul.f32.gmra.mxu0 %v339
    %v422 = vpop.f32.mrf.mxu0
    %v423 = vadd.f32 %v358, %v422
    %424 = vdwg.mxu0
    %v425 = vmax.f32 %v378, 0.0
    %v426 = vmax.f32 %v381, 0.0
    %v427 = vmax.f32 %v384, 0.0
    %v428 = vmax.f32 %v387, 0.0
    %v429 = vmax.f32 %v390, 0.0
    %v430 = vmax.f32 %v393, 0.0
    %v431 = vmax.f32 %v396, 0.0
    %v432 = vmax.f32 %v399, 0.0
    %v433 = vmax.f32 %v402, 0.0
    %v434 = vmax.f32 %v405, 0.0
    %v435 = vmax.f32 %v408, 0.0
    %v436 = vmax.f32 %v411, 0.0
    %v437 = vmax.f32 %v414, 0.0
    %v438 = vmax.f32 %v417, 0.0
    %v439 = vmax.f32 %v420, 0.0
    %v440 = vmax.f32 %v423, 0.0
    %v441 = vld [vmem:[#allocation6] sm:$0xff]
    %v442 = vld [vmem:[#allocation6 + $0x8] sm:$0xff]
    %v443 = vld [vmem:[#allocation6 + $0x10] sm:$0xff]
    %v444 = vld [vmem:[#allocation6 + $0x18] sm:$0xff]
    %v445 = vld [vmem:[#allocation6 + $0x20] sm:$0xff]
    %v446 = vld [vmem:[#allocation6 + $0x28] sm:$0xff]
    %v447 = vld [vmem:[#allocation6 + $0x30] sm:$0xff]
    %v448 = vld [vmem:[#allocation6 + $0x38] sm:$0xff]
    %v449 = vld [vmem:[#allocation6 + $0x40] sm:$0xff]
    %v450 = vld [vmem:[#allocation6 + $0x48] sm:$0xff]
    %v451 = vld [vmem:[#allocation6 + $0x50] sm:$0xff]
    %v452 = vld [vmem:[#allocation6 + $0x58] sm:$0xff]
    %v453 = vld [vmem:[#allocation6 + $0x60] sm:$0xff]
    %v454 = vld [vmem:[#allocation6 + $0x68] sm:$0xff]
    %v455 = vld [vmem:[#allocation6 + $0x70] sm:$0xff]
    %v456 = vld [vmem:[#allocation6 + $0x78] sm:$0xff]
    %v457 = vld [vmem:[%s8] sm:$0x1]
    %v459 = vperm.slane %v457, 0
    %461 = vmatpush.msra.mxu0 %v456
    %462 = vmatpush.msra.mxu0 %v455
    %463 = vmatpush.msra.mxu0 %v454
    %464 = vmatpush.msra.mxu0 %v453
    %465 = vmatpush.msra.mxu0 %v452
    %466 = vmatpush.msra.mxu0 %v451
    %467 = vmatpush.msra.mxu0 %v450
    %468 = vmatpush.msra.mxu0 %v449
    %469 = vmatpush.msra.mxu0 %v448
    %470 = vmatpush.msra.mxu0 %v447
    %471 = vmatpush.msra.mxu0 %v446
    %472 = vmatpush.msra.mxu0 %v445
    %473 = vmatpush.msra.mxu0 %v444
    %474 = vmatpush.msra.mxu0 %v443
    %475 = vmatpush.msra.mxu0 %v442
    %476 = vmatpush.msra.mxu0 %v441
    %477 = vmatmul.f32.gmra.mxu0 %v425
    %v478 = vpop.f32.mrf.mxu0
    %v479 = vadd.f32 %v459, %v478
    %480 = vmatmul.f32.gmra.mxu0 %v426
    %v481 = vpop.f32.mrf.mxu0
    %v482 = vadd.f32 %v459, %v481
    %483 = vmatmul.f32.gmra.mxu0 %v427
    %v484 = vpop.f32.mrf.mxu0
    %v485 = vadd.f32 %v459, %v484
    %486 = vmatmul.f32.gmra.mxu0 %v428
    %v487 = vpop.f32.mrf.mxu0
    %v488 = vadd.f32 %v459, %v487
    %489 = vmatmul.f32.gmra.mxu0 %v429
    %v490 = vpop.f32.mrf.mxu0
    %v491 = vadd.f32 %v459, %v490
    %492 = vmatmul.f32.gmra.mxu0 %v430
    %v493 = vpop.f32.mrf.mxu0
    %v494 = vadd.f32 %v459, %v493
    %495 = vmatmul.f32.gmra.mxu0 %v431
    %v496 = vpop.f32.mrf.mxu0
    %v497 = vadd.f32 %v459, %v496
    %498 = vmatmul.f32.gmra.mxu0 %v432
    %v499 = vpop.f32.mrf.mxu0
    %v500 = vadd.f32 %v459, %v499
    %501 = vmatmul.f32.gmra.mxu0 %v433
    %v502 = vpop.f32.mrf.mxu0
    %v503 = vadd.f32 %v459, %v502
    %504 = vmatmul.f32.gmra.mxu0 %v434
    %v505 = vpop.f32.mrf.mxu0
    %v506 = vadd.f32 %v459, %v505
    %507 = vmatmul.f32.gmra.mxu0 %v435
    %v508 = vpop.f32.mrf.mxu0
    %v509 = vadd.f32 %v459, %v508
    %510 = vmatmul.f32.gmra.mxu0 %v436
    %v511 = vpop.f32.mrf.mxu0
    %v512 = vadd.f32 %v459, %v511
    %513 = vmatmul.f32.gmra.mxu0 %v437
    %v514 = vpop.f32.mrf.mxu0
    %v515 = vadd.f32 %v459, %v514
    %516 = vmatmul.f32.gmra.mxu0 %v438
    %v517 = vpop.f32.mrf.mxu0
    %v518 = vadd.f32 %v459, %v517
    %519 = vmatmul.f32.gmra.mxu0 %v439
    %v520 = vpop.f32.mrf.mxu0
    %v521 = vadd.f32 %v459, %v520
    %522 = vmatmul.f32.gmra.mxu0 %v440
    %v523 = vpop.f32.mrf.mxu0
    %v524 = vadd.f32 %v459, %v523
    %525 = vdwg.mxu0
    %v526 = vmax.f32 %v479, 0.0
    %v527 = vmax.f32 %v482, 0.0
    %v528 = vmax.f32 %v485, 0.0
    %v529 = vmax.f32 %v488, 0.0
    %v530 = vmax.f32 %v491, 0.0
    %v531 = vmax.f32 %v494, 0.0
    %v532 = vmax.f32 %v497, 0.0
    %v533 = vmax.f32 %v500, 0.0
    %v534 = vmax.f32 %v503, 0.0
    %v535 = vmax.f32 %v506, 0.0
    %v536 = vmax.f32 %v509, 0.0
    %v537 = vmax.f32 %v512, 0.0
    %v538 = vmax.f32 %v515, 0.0
    %v539 = vmax.f32 %v518, 0.0
    %v540 = vmax.f32 %v521, 0.0
    %v541 = vmax.f32 %v524, 0.0
    %v542 = vld [vmem:[%s9] sm:$0x1]
    %v544 = vperm.slane %v542, 0
    %v546 = vmul.f32 %v526, %v544
    %v547 = vmul.f32 %v527, %v544
    %v548 = vmul.f32 %v528, %v544
    %v549 = vmul.f32 %v529, %v544
    %v550 = vmul.f32 %v530, %v544
    %v551 = vmul.f32 %v531, %v544
    %v552 = vmul.f32 %v532, %v544
    %v553 = vmul.f32 %v533, %v544
    %v554 = vmul.f32 %v534, %v544
    %v555 = vmul.f32 %v535, %v544
    %v556 = vmul.f32 %v536, %v544
    %v557 = vmul.f32 %v537, %v544
    %v558 = vmul.f32 %v538, %v544
    %v559 = vmul.f32 %v539, %v544
    %v560 = vmul.f32 %v540, %v544
    %v561 = vmul.f32 %v541, %v544
    %562 = vadd.xlane.f32.xlu0 %v546
    %v563 = vpop.xlane.xlu0 %562
    %564 = vadd.xlane.f32.xlu0 %v547
    %v565 = vpop.xlane.xlu0 %564
    %566 = vadd.xlane.f32.xlu0 %v548
    %v567 = vpop.xlane.xlu0 %566
    %568 = vadd.xlane.f32.xlu0 %v549
    %v569 = vpop.xlane.xlu0 %568
    %570 = vadd.xlane.f32.xlu0 %v550
    %v571 = vpop.xlane.xlu0 %570
    %572 = vadd.xlane.f32.xlu0 %v551
    %v573 = vpop.xlane.xlu0 %572
    %574 = vadd.xlane.f32.xlu0 %v552
    %v575 = vpop.xlane.xlu0 %574
    %576 = vadd.xlane.f32.xlu0 %v553
    %v577 = vpop.xlane.xlu0 %576
    %578 = vadd.xlane.f32.xlu0 %v554
    %v579 = vpop.xlane.xlu0 %578
    %580 = vadd.xlane.f32.xlu0 %v555
    %v581 = vpop.xlane.xlu0 %580
    %582 = vadd.xlane.f32.xlu0 %v556
    %v583 = vpop.xlane.xlu0 %582
    %584 = vadd.xlane.f32.xlu0 %v557
    %v585 = vpop.xlane.xlu0 %584
    %586 = vadd.xlane.f32.xlu0 %v558
    %v587 = vpop.xlane.xlu0 %586
    %588 = vadd.xlane.f32.xlu0 %v559
    %v589 = vpop.xlane.xlu0 %588
    %590 = vadd.xlane.f32.xlu0 %v560
    %v591 = vpop.xlane.xlu0 %590
    %592 = vadd.xlane.f32.xlu0 %v561
    %v593 = vpop.xlane.xlu0 %592
    %v594 = vld [vmem:[%s10] sm:$0x1]
    %v596 = vperm.slane %v594, 0
    %v597 = vlaneseq
    %v598 = vshrl.u32 %v597, 7
    %600 = vset.pattern.permute.xlu0 %v598
    %601 = vperm.xlu0 %600, %v596
    %v602 = vpop.permute.xlu0 %601
    %v603 = vlaneseq
    %v604 = vshrl.u32 %v603, 7
    %v605 = vadd.s32 %v604, 8
    %606 = vset.pattern.permute.xlu0 %v605
    %607 = vperm.xlu0 %606, %v596
    %v608 = vpop.permute.xlu0 %607
    %v609 = vlaneseq
    %v610 = vshrl.u32 %v609, 7
    %v611 = vadd.s32 %v610, 16
    %612 = vset.pattern.permute.xlu0 %v611
    %613 = vperm.xlu0 %612, %v596
    %v614 = vpop.permute.xlu0 %613
    %v615 = vlaneseq
    %v616 = vshrl.u32 %v615, 7
    %v617 = vadd.s32 %v616, 24
    %618 = vset.pattern.permute.xlu0 %v617
    %619 = vperm.xlu0 %618, %v596
    %v620 = vpop.permute.xlu0 %619
    %v621 = vlaneseq
    %v622 = vshrl.u32 %v621, 7
    %v623 = vadd.s32 %v622, 32
    %624 = vset.pattern.permute.xlu0 %v623
    %625 = vperm.xlu0 %624, %v596
    %v626 = vpop.permute.xlu0 %625
    %v627 = vlaneseq
    %v628 = vshrl.u32 %v627, 7
    %v629 = vadd.s32 %v628, 40
    %630 = vset.pattern.permute.xlu0 %v629
    %631 = vperm.xlu0 %630, %v596
    %v632 = vpop.permute.xlu0 %631
    %v633 = vlaneseq
    %v634 = vshrl.u32 %v633, 7
    %v635 = vadd.s32 %v634, 48
    %636 = vset.pattern.permute.xlu0 %v635
    %637 = vperm.xlu0 %636, %v596
    %v638 = vpop.permute.xlu0 %637
    %v639 = vlaneseq
    %v640 = vshrl.u32 %v639, 7
    %v641 = vadd.s32 %v640, 56
    %642 = vset.pattern.permute.xlu0 %v641
    %643 = vperm.xlu0 %642, %v596
    %v644 = vpop.permute.xlu0 %643
    %v645 = vlaneseq
    %v646 = vshrl.u32 %v645, 7
    %v647 = vadd.s32 %v646, 64
    %648 = vset.pattern.permute.xlu0 %v647
    %649 = vperm.xlu0 %648, %v596
    %v650 = vpop.permute.xlu0 %649
    %v651 = vlaneseq
    %v652 = vshrl.u32 %v651, 7
    %v653 = vadd.s32 %v652, 72
    %654 = vset.pattern.permute.xlu0 %v653
    %655 = vperm.xlu0 %654, %v596
    %v656 = vpop.permute.xlu0 %655
    %v657 = vlaneseq
    %v658 = vshrl.u32 %v657, 7
    %v659 = vadd.s32 %v658, 80
    %660 = vset.pattern.permute.xlu0 %v659
    %661 = vperm.xlu0 %660, %v596
    %v662 = vpop.permute.xlu0 %661
    %v663 = vlaneseq
    %v664 = vshrl.u32 %v663, 7
    %v665 = vadd.s32 %v664, 88
    %666 = vset.pattern.permute.xlu0 %v665
    %667 = vperm.xlu0 %666, %v596
    %v668 = vpop.permute.xlu0 %667
    %v669 = vlaneseq
    %v670 = vshrl.u32 %v669, 7
    %v671 = vadd.s32 %v670, 96
    %672 = vset.pattern.permute.xlu0 %v671
    %673 = vperm.xlu0 %672, %v596
    %v674 = vpop.permute.xlu0 %673
    %v675 = vlaneseq
    %v676 = vshrl.u32 %v675, 7
    %v677 = vadd.s32 %v676, 104
    %678 = vset.pattern.permute.xlu0 %v677
    %679 = vperm.xlu0 %678, %v596
    %v680 = vpop.permute.xlu0 %679
    %v681 = vlaneseq
    %v682 = vshrl.u32 %v681, 7
    %v683 = vadd.s32 %v682, 112
    %684 = vset.pattern.permute.xlu0 %v683
    %685 = vperm.xlu0 %684, %v596
    %v686 = vpop.permute.xlu0 %685
    %v687 = vlaneseq
    %v688 = vshrl.u32 %v687, 7
    %v689 = vadd.s32 %v688, 120
    %690 = vset.pattern.permute.xlu0 %v689
    %691 = vperm.xlu0 %690, %v596
    %v692 = vpop.permute.xlu0 %691
    %v709 = vadd.f32 %v563, %v602
    %v710 = vadd.f32 %v565, %v608
    %v711 = vadd.f32 %v567, %v614
    %v712 = vadd.f32 %v569, %v620
    %v713 = vadd.f32 %v571, %v626
    %v714 = vadd.f32 %v573, %v632
    %v715 = vadd.f32 %v575, %v638
    %v716 = vadd.f32 %v577, %v644
    %v717 = vadd.f32 %v579, %v650
    %v718 = vadd.f32 %v581, %v656
    %v719 = vadd.f32 %v583, %v662
    %v720 = vadd.f32 %v585, %v668
    %v721 = vadd.f32 %v587, %v674
    %v722 = vadd.f32 %v589, %v680
    %v723 = vadd.f32 %v591, %v686
    %v724 = vadd.f32 %v593, %v692
    %741 = vset.pattern.permute.xlu0 0
    %742 = vperm.xlu0 %741, %v709
    %v743 = vpop.permute.xlu0 %742
    %744 = vset.pattern.permute.xlu0 0
    %745 = vperm.xlu0 %744, %v710
    %v746 = vpop.permute.xlu0 %745
    %747 = vset.pattern.permute.xlu0 0
    %748 = vperm.xlu0 %747, %v711
    %v749 = vpop.permute.xlu0 %748
    %750 = vset.pattern.permute.xlu0 0
    %751 = vperm.xlu0 %750, %v712
    %v752 = vpop.permute.xlu0 %751
    %753 = vset.pattern.permute.xlu0 0
    %754 = vperm.xlu0 %753, %v713
    %v755 = vpop.permute.xlu0 %754
    %756 = vset.pattern.permute.xlu0 0
    %757 = vperm.xlu0 %756, %v714
    %v758 = vpop.permute.xlu0 %757
    %759 = vset.pattern.permute.xlu0 0
    %760 = vperm.xlu0 %759, %v715
    %v761 = vpop.permute.xlu0 %760
    %762 = vset.pattern.permute.xlu0 0
    %763 = vperm.xlu0 %762, %v716
    %v764 = vpop.permute.xlu0 %763
    %765 = vset.pattern.permute.xlu0 0
    %766 = vperm.xlu0 %765, %v717
    %v767 = vpop.permute.xlu0 %766
    %768 = vset.pattern.permute.xlu0 0
    %769 = vperm.xlu0 %768, %v718
    %v770 = vpop.permute.xlu0 %769
    %771 = vset.pattern.permute.xlu0 0
    %772 = vperm.xlu0 %771, %v719
    %v773 = vpop.permute.xlu0 %772
    %774 = vset.pattern.permute.xlu0 0
    %775 = vperm.xlu0 %774, %v720
    %v776 = vpop.permute.xlu0 %775
    %777 = vset.pattern.permute.xlu0 0
    %778 = vperm.xlu0 %777, %v721
    %v779 = vpop.permute.xlu0 %778
    %780 = vset.pattern.permute.xlu0 0
    %781 = vperm.xlu0 %780, %v722
    %v782 = vpop.permute.xlu0 %781
    %783 = vset.pattern.permute.xlu0 0
    %784 = vperm.xlu0 %783, %v723
    %v785 = vpop.permute.xlu0 %784
    %786 = vset.pattern.permute.xlu0 0
    %787 = vperm.xlu0 %786, %v724
    %v788 = vpop.permute.xlu0 %787
    %v789 = vlaneseq
    %v790 = vand.u32 %v789, 127
    %v791 = vperm.slane %v743, %v790
    %v792 = vadd.s32 %v790, 4294967288
    %v793 = vperm.slane %v746, %v792
    %vm794 = vcmask 130112
    %v795 = vsel %vm794, %v793, %v791
    %v796 = vadd.s32 %v790, 4294967280
    %v797 = vperm.slane %v749, %v796
    %vm798 = vcmask 195712
    %v799 = vsel %vm798, %v797, %v795
    %v800 = vadd.s32 %v790, 4294967272
    %v801 = vperm.slane %v752, %v800
    %vm802 = vcmask 261312
    %v803 = vsel %vm802, %v801, %v799
    %v804 = vadd.s32 %v790, 4294967264
    %v805 = vperm.slane %v755, %v804
    %vm806 = vcmask 326912
    %v807 = vsel %vm806, %v805, %v803
    %v808 = vadd.s32 %v790, 4294967256
    %v809 = vperm.slane %v758, %v808
    %vm810 = vcmask 392512
    %v811 = vsel %vm810, %v809, %v807
    %v812 = vadd.s32 %v790, 4294967248
    %v813 = vperm.slane %v761, %v812
    %vm814 = vcmask 458112
    %v815 = vsel %vm814, %v813, %v811
    %v816 = vadd.s32 %v790, 4294967240
    %v817 = vperm.slane %v764, %v816
    %vm818 = vcmask 523712
    %v819 = vsel %vm818, %v817, %v815
    %v820 = vadd.s32 %v790, 4294967232
    %v821 = vperm.slane %v767, %v820
    %vm822 = vcmask 589312
    %v823 = vsel %vm822, %v821, %v819
    %v824 = vadd.s32 %v790, 4294967224
    %v825 = vperm.slane %v770, %v824
    %vm826 = vcmask 654912
    %v827 = vsel %vm826, %v825, %v823
    %v828 = vadd.s32 %v790, 4294967216
    %v829 = vperm.slane %v773, %v828
    %vm830 = vcmask 720512
    %v831 = vsel %vm830, %v829, %v827
    %v832 = vadd.s32 %v790, 4294967208
    %v833 = vperm.slane %v776, %v832
    %vm834 = vcmask 786112
    %v835 = vsel %vm834, %v833, %v831
    %v836 = vadd.s32 %v790, 4294967200
    %v837 = vperm.slane %v779, %v836
    %vm838 = vcmask 851712
    %v839 = vsel %vm838, %v837, %v835
    %v840 = vadd.s32 %v790, 4294967192
    %v841 = vperm.slane %v782, %v840
    %vm842 = vcmask 917312
    %v843 = vsel %vm842, %v841, %v839
    %v844 = vadd.s32 %v790, 4294967184
    %v845 = vperm.slane %v785, %v844
    %vm846 = vcmask 982912
    %v847 = vsel %vm846, %v845, %v843
    %v848 = vadd.s32 %v790, 4294967176
    %v849 = vperm.slane %v788, %v848
    %vm850 = vcmask 1048512
    %v851 = vsel %vm850, %v849, %v847
    %853 = vst [vmem:[%s11] sm:$0x1] %v851
    // Predicated region
    $region58: #{network3_forward.1} parent=1 // pred_check
      _
    $region59: #{network3_forward.1} parent=1 // pred_check_branch
      %855 = sbr.rel (0) target = $region61
    $region60: #{network3_forward.1} parent=1 // pred_region
      _
    $region61: #{network3_forward.1} parent=1 // pred_fallthru
      _
    // Predicated region
    $region62: #{network3_forward.1} parent=1 // pred_check
      _
    $region63: #{network3_forward.1} parent=1 // pred_check_branch
      %857 = sbr.rel (0) target = $region65
    $region64: #{network3_forward.1} parent=1 // pred_region
      _
    $region65: #{network3_forward.1} parent=1 // pred_fallthru
      _
    %858 = vsyncpa [#allocation3], 1
    %859 = vsyncpa [#allocation5], 1

</llo_original>
